<compile_context>
chip_gen: v7x
topology: tpu7x:2x2x1
jax: 0.10.0
libtpu: 0.0.40
codegen_flags: <defaults>
</compile_context>

<pallas_src>
from functools import partial

import jax
import jax.numpy as jnp
from jax.experimental import pallas as pl
from jax.experimental.pallas import tpu as pltpu


def linearized_mlp_kernel(x_ref, w1c_ref, b1c_ref, w2c_ref, b2s_ref, o_ref, *, hidden):
    x = x_ref[...]                                                       # (TB, Din)

    # Fused primal+tangent layer-1 matmul: [z0 | dz] in one MXU pass.
    zd = jnp.dot(x, w1c_ref[...], preferred_element_type=jnp.float32)    # (TB, 2H)
    zd = zd + b1c_ref[...]
    z0 = zd[:, :hidden]                                                  # (TB, H)
    dz = zd[:, hidden:]                                                  # (TB, H)

    # ReLU primal + JVP (kept in f32 on the VPU).
    h0 = jnp.maximum(z0, 0.0)
    dh = jnp.where(z0 > 0.0, dz, 0.0)

    # Fused layer-2 matmul: (h0+dh) @ W2^T + h0 @ dW2^T  ==  [h0+dh | h0] @ [[W2^T],[dW2^T]]
    a = jnp.concatenate([h0 + dh, h0], axis=1)                           # (TB, 2H)
    out = jnp.dot(a, w2c_ref[...], preferred_element_type=jnp.float32)   # (TB, Dout_pad)
    out = out + b2s_ref[...]

    o_ref[...] = out.astype(o_ref.dtype)


def linearized_mlp_forward(x, params0, params, *, tile_b=256):
    """params0 / params: dicts with 'w1' (H,Din), 'b1' (H,), 'w2' (Dout,H), 'b2' (Dout,)."""
    B, Din = x.shape
    H = params0["w1"].shape[0]
    Dout = params0["w2"].shape[0]
    dtype = x.dtype

    # dparams = theta - theta0 (plain-XLA glue, fuses for free).
    dw1 = params["w1"] - params0["w1"]
    db1 = params["b1"] - params0["b1"]
    dw2 = params["w2"] - params0["w2"]
    db2 = params["b2"] - params0["b2"]

    # Pre-transposed, pre-concatenated weights (lane-aligned contractions, no in-kernel .T).
    w1_cat = jnp.concatenate([params0["w1"].T, dw1.T], axis=1)           # (Din, 2H)
    b1_cat = jnp.concatenate([params0["b1"], db1], axis=0)[None, :]      # (1, 2H)
    w2_cat = jnp.concatenate([params0["w2"].T, dw2.T], axis=0)           # (2H, Dout)
    b2_sum = (params0["b2"] + db2)[None, :]                              # (1, Dout)

    # Lane-dense output: pad Dout up to a multiple of 128; slice back after the call.
    dout_pad = max(128, -(-Dout // 128) * 128)
    if dout_pad != Dout:
        w2_cat = jnp.pad(w2_cat, ((0, 0), (0, dout_pad - Dout)))
        b2_sum = jnp.pad(b2_sum, ((0, 0), (0, dout_pad - Dout)))

    # Batch grid: tile must be a multiple of 8 sublanes; pad B if needed.
    tb = min(tile_b, -(-B // 8) * 8)
    b_pad = -(-B // tb) * tb
    if b_pad != B:
        x = jnp.pad(x, ((0, b_pad - B), (0, 0)))
    grid = (b_pad // tb,)

    out = pl.pallas_call(
        partial(linearized_mlp_kernel, hidden=H),
        out_shape=jax.ShapeDtypeStruct((b_pad, dout_pad), dtype),
        grid_spec=pltpu.PrefetchScalarGridSpec(
            num_scalar_prefetch=0,
            grid=grid,
            in_specs=[
                pl.BlockSpec((tb, Din), lambda i: (i, 0)),            # x tile (pipelined)
                pl.BlockSpec((Din, 2 * H), lambda i: (0, 0)),         # [W1^T | dW1^T]  (resident)
                pl.BlockSpec((1, 2 * H), lambda i: (0, 0)),           # [b1 | db1]      (resident)
                pl.BlockSpec((2 * H, dout_pad), lambda i: (0, 0)),    # [[W2^T],[dW2^T]](resident)
                pl.BlockSpec((1, dout_pad), lambda i: (0, 0)),        # b2 + db2        (resident)
            ],
            out_specs=pl.BlockSpec((tb, dout_pad), lambda i: (i, 0)),
        ),
        compiler_params=pltpu.CompilerParams(
            dimension_semantics=("parallel",),          # batch axis shards across TCs on v7x
            vmem_limit_bytes=64 * 1024 * 1024,
        ),
    )(x, w1_cat, b1_cat, w2_cat, b2_sum)

    return out[:B, :Dout]


def _ref_forward(x, params0, params):
    """Pure-JAX reference: f(theta0) + jvp(f, theta0, theta - theta0)."""
    def f(w1, b1, w2, b2):
        h = jnp.maximum(x @ w1.T + b1, 0.0)
        return h @ w2.T + b2

    p0 = (params0["w1"], params0["b1"], params0["w2"], params0["b2"])
    dp = tuple(params[k] - params0[k] for k in ("w1", "b1", "w2", "b2"))
    out, tangent = jax.jvp(f, p0, dp)
    return out + tangent


if __name__ == "__main__":
    # TODO(synk): the PyTorch wrapper linearizes an arbitrary nn.Module via torch.func.jvp;
    # here the wrapped model is specialized to a concrete 2-layer ReLU MLP with the JVP
    # expanded analytically (semantically identical for that architecture).
    B, Din, H, Dout = 8, 32, 64, 32
    key = jax.random.PRNGKey(0)
    kx, k1, k2, k3, k4, k5, k6, k7, k8 = jax.random.split(key, 9)

    x = jax.random.normal(kx, (B, Din), dtype=jnp.float32)

    # theta0 (frozen linearization point) and theta (current fine-tuned params).
    params0 = {
        "w1": jax.random.normal(k1, (H, Din), dtype=jnp.float32) * 0.1,
        "b1": jax.random.normal(k2, (H,), dtype=jnp.float32) * 0.1,
        "w2": jax.random.normal(k3, (Dout, H), dtype=jnp.float32) * 0.1,
        "b2": jax.random.normal(k4, (Dout,), dtype=jnp.float32) * 0.1,
    }
    params = {
        "w1": params0["w1"] + jax.random.normal(k5, (H, Din), dtype=jnp.float32) * 0.05,
        "b1": params0["b1"] + jax.random.normal(k6, (H,), dtype=jnp.float32) * 0.05,
        "w2": params0["w2"] + jax.random.normal(k7, (Dout, H), dtype=jnp.float32) * 0.05,
        "b2": params0["b2"] + jax.random.normal(k8, (Dout,), dtype=jnp.float32) * 0.05,
    }

    out = linearized_mlp_forward(x, params0, params)
    out = jax.block_until_ready(out)

    ref = _ref_forward(x, params0, params)
    assert out.shape == (B, Dout)
    assert jnp.allclose(out, ref, atol=1e-5, rtol=1e-5), "mismatch vs jax.jvp reference"

    print("KERNEL_OK")
</pallas_src>

<mosaic_0001>
module attributes {stable_mosaic.version = 11 : i64} {
  func.func @linearized_mlp_kernel(%arg0: i32, %arg1: memref<8x32xf32, #tpu.memory_space<vmem>>, %arg2: memref<32x128xf32, #tpu.memory_space<vmem>>, %arg3: memref<1x128xf32, #tpu.memory_space<vmem>>, %arg4: memref<128x128xf32, #tpu.memory_space<vmem>>, %arg5: memref<1x128xf32, #tpu.memory_space<vmem>>, %arg6: memref<8x128xf32, #tpu.memory_space<vmem>>) attributes {dimension_semantics = [#tpu.dimension_semantics<parallel>], iteration_bounds = array<i64: 1>, scalar_prefetch = 0 : i64, scratch_operands = 0 : i64, tpu.core_type = #tpu.core_type<tc>, window_params = [{transform_indices = @transform_0, window_bounds = array<i64: 8, 32>}, {pipeline_mode = #tpu.pipeline_mode<synchronous>, transform_indices = @transform_1, window_bounds = array<i64: 32, 128>}, {pipeline_mode = #tpu.pipeline_mode<synchronous>, transform_indices = @transform_2, window_bounds = array<i64: 1, 128>}, {pipeline_mode = #tpu.pipeline_mode<synchronous>, transform_indices = @transform_3, window_bounds = array<i64: 128, 128>}, {pipeline_mode = #tpu.pipeline_mode<synchronous>, transform_indices = @transform_4, window_bounds = array<i64: 1, 128>}, {transform_indices = @transform_5, window_bounds = array<i64: 8, 128>}]} {
    %c0 = arith.constant 0 : index
    %c0_0 = arith.constant 0 : index
    %0 = vector.load %arg1[%c0, %c0_0] : memref<8x32xf32, #tpu.memory_space<vmem>>, vector<8x32xf32>
    %c0_1 = arith.constant 0 : index
    %c0_2 = arith.constant 0 : index
    %1 = vector.load %arg2[%c0_1, %c0_2] : memref<32x128xf32, #tpu.memory_space<vmem>>, vector<32x128xf32>
    %cst = arith.constant dense<0.000000e+00> : vector<8x128xf32>
    %2 = tpu.matmul %0, %1, %cst {dimension_numbers = #tpu.dot_dimension_numbers<[1], [0], [0], [1], [0, 0, 1, 1], [], []>} : vector<8x32xf32>, vector<32x128xf32>, vector<8x128xf32> -> vector<8x128xf32>
    %c0_3 = arith.constant 0 : index
    %c0_4 = arith.constant 0 : index
    %3 = vector.load %arg3[%c0_3, %c0_4] : memref<1x128xf32, #tpu.memory_space<vmem>>, vector<1x128xf32>
    %4 = vector.broadcast %3 : vector<1x128xf32> to vector<8x128xf32>
    %5 = arith.addf %2, %4 : vector<8x128xf32>
    %6 = vector.extract_strided_slice %5 {offsets = [0, 0], sizes = [8, 64], strides = [1, 1]} : vector<8x128xf32> to vector<8x64xf32>
    %7 = vector.extract_strided_slice %5 {offsets = [0, 64], sizes = [8, 64], strides = [1, 1]} : vector<8x128xf32> to vector<8x64xf32>
    %cst_5 = arith.constant 0.000000e+00 : f32
    %8 = vector.broadcast %cst_5 : f32 to vector<8x64xf32>
    %9 = arith.maximumf %6, %8 : vector<8x64xf32>
    %cst_6 = arith.constant 0.000000e+00 : f32
    %10 = vector.broadcast %cst_6 : f32 to vector<8x64xf32>
    %11 = arith.cmpf ogt, %6, %10 : vector<8x64xf32>
    %cst_7 = arith.constant 0.000000e+00 : f32
    %12 = vector.broadcast %cst_7 : f32 to vector<8x64xf32>
    %13 = arith.select %11, %7, %12 : vector<8x64xi1>, vector<8x64xf32>
    %14 = arith.addf %9, %13 : vector<8x64xf32>
    %15 = tpu.concatenate %14, %9 in 1 : vector<8x64xf32>, vector<8x64xf32> -> vector<8x128xf32>
    %c0_8 = arith.constant 0 : index
    %c0_9 = arith.constant 0 : index
    %16 = vector.load %arg4[%c0_8, %c0_9] : memref<128x128xf32, #tpu.memory_space<vmem>>, vector<128x128xf32>
    %cst_10 = arith.constant dense<0.000000e+00> : vector<8x128xf32>
    %17 = tpu.matmul %15, %16, %cst_10 {dimension_numbers = #tpu.dot_dimension_numbers<[1], [0], [0], [1], [0, 0, 1, 1], [], []>} : vector<8x128xf32>, vector<128x128xf32>, vector<8x128xf32> -> vector<8x128xf32>
    %c0_11 = arith.constant 0 : index
    %c0_12 = arith.constant 0 : index
    %18 = vector.load %arg5[%c0_11, %c0_12] : memref<1x128xf32, #tpu.memory_space<vmem>>, vector<1x128xf32>
    %19 = vector.broadcast %18 : vector<1x128xf32> to vector<8x128xf32>
    %20 = arith.addf %17, %19 : vector<8x128xf32>
    %c0_13 = arith.constant 0 : index
    %c0_14 = arith.constant 0 : index
    %21 = vector.load %arg6[%c0_13, %c0_14] : memref<8x128xf32, #tpu.memory_space<vmem>>, vector<8x128xf32>
    tpu.vector_store %arg6[%c0_13, %c0_14], %20 {strides = array<i32>} : memref<8x128xf32, #tpu.memory_space<vmem>>, vector<8x128xf32>,
    return
  }
  func.func @transform_0(%arg0: i32) -> (i32, i32) {
    %c0_i32 = arith.constant 0 : i32
    %c0_i32_0 = arith.constant 0 : i32
    return %arg0, %c0_i32 : i32, i32
  }
  func.func @transform_1(%arg0: i32) -> (i32, i32) {
    %c0_i32 = arith.constant 0 : i32
    %c0_i32_0 = arith.constant 0 : i32
    %c0_i32_1 = arith.constant 0 : i32
    return %c0_i32, %c0_i32_0 : i32, i32
  }
  func.func @transform_2(%arg0: i32) -> (i32, i32) {
    %c0_i32 = arith.constant 0 : i32
    %c0_i32_0 = arith.constant 0 : i32
    %c0_i32_1 = arith.constant 0 : i32
    return %c0_i32, %c0_i32_0 : i32, i32
  }
  func.func @transform_3(%arg0: i32) -> (i32, i32) {
    %c0_i32 = arith.constant 0 : i32
    %c0_i32_0 = arith.constant 0 : i32
    %c0_i32_1 = arith.constant 0 : i32
    return %c0_i32, %c0_i32_0 : i32, i32
  }
  func.func @transform_4(%arg0: i32) -> (i32, i32) {
    %c0_i32 = arith.constant 0 : i32
    %c0_i32_0 = arith.constant 0 : i32
    %c0_i32_1 = arith.constant 0 : i32
    return %c0_i32, %c0_i32_0 : i32, i32
  }
  func.func @transform_5(%arg0: i32) -> (i32, i32) {
    %c0_i32 = arith.constant 0 : i32
    %c0_i32_0 = arith.constant 0 : i32
    return %arg0, %c0_i32 : i32, i32
  }
}

</mosaic_0001>

<llo_original>
// kernel: tpu_custom_call.1
$region0: #{tpu_custom_call.1}
  #allocation0 [shape = 'u32[]', space=smem, size = 0x4, offset = 0x4, fixed_abs, tag = 'smem constant byte address 0x4 - core index']
  #allocation1 [shape = 'u32[144,128]{1,0:T(1,128)}', space=vmem, size = 0x12000, scoped, tag = 'internal scratch']
  %s0 = inlined_call_operand.hbm [shape: f32[8,32], index: 0, kind: input, shape index: {}]
  %s1 = inlined_call_operand.hbm [shape: f32[32,128], index: 1, kind: input, shape index: {}]
  %s2 = inlined_call_operand.hbm [shape: f32[1,128], index: 2, kind: input, shape index: {}]
  %s3 = inlined_call_operand.hbm [shape: f32[128,128], index: 3, kind: input, shape index: {}]
  %s4 = inlined_call_operand.hbm [shape: f32[1,128], index: 4, kind: input, shape index: {}]
  %s5 = inlined_call_operand.hbm [shape: f32[8,128], index: 5, kind: output, shape index: {}]
  %s6 = sld [smem:[#allocation0]]
  $region50: #{tpu_custom_call.1} parent=0
    _
  %s8 = ssub.s32 1, %s6
  %s9 = scalar_select 0, %s8, %s6
  $region1: #{tpu_custom_call.1} parent=0
    #allocation2 [shape = 'u8[4096]{0}', space=vmem, size = 0x1000, scoped, tag = 'input window, operand 0, single buffered']
    #allocation3 [shape = 's32[1]{0}', space=sflag, size = 0x4, scoped, tag = 'scoped memory for tpu_custom_call.1']
    #allocation4 [shape = 's32[1]{0}', space=sflag, size = 0x4, scoped, tag = 'scoped memory for tpu_custom_call.1']
    #allocation5 [shape = 'u8[16384]{0}', space=vmem, size = 0x4000, scoped, tag = 'input window, operand 1, single buffered']
    #allocation6 [shape = 's32[1]{0}', space=sflag, size = 0x4, scoped, tag = 'scoped memory for tpu_custom_call.1']
    #allocation7 [shape = 'u8[512]{0}', space=vmem, size = 0x400, scoped, tag = 'input window, operand 2, single buffered']
    #allocation8 [shape = 'u8[65536]{0}', space=vmem, size = 0x10000, scoped, tag = 'input window, operand 3, single buffered']
    #allocation9 [shape = 's32[1]{0}', space=sflag, size = 0x4, scoped, tag = 'scoped memory for tpu_custom_call.1']
    #allocation10 [shape = 'u8[512]{0}', space=vmem, size = 0x400, scoped, tag = 'input window, operand 4, single buffered']
    #allocation11 [shape = 'u8[4096]{0}', space=vmem, size = 0x1000, scoped, tag = 'output window, operand 0, single buffered']
    %10 = vsyncpa [#allocation3], 0
    %11 = vsyncpa [#allocation6], 0
    %12 = vsyncpa [#allocation9], 0
    %13 = vsyncpa [#allocation4], 0
    // Predicated region
    $region2: #{tpu_custom_call.1} parent=1 // pred_check
      _
    $region3: #{tpu_custom_call.1} parent=1 // pred_check_branch
      %15 = sbr.rel (0) target = $region5
    $region4: #{tpu_custom_call.1} parent=1 // pred_region
      %s17 = ssub.s32 128, 128
      %18 = vsyncadd [#allocation3], %s17
      %s20 = sshll.u32 [#allocation2], 4
      %s21 = int_to_ptr.vmem [resolvable:$true] %s20
      %23 = dma.hbm_to_vmem [thread:$0]  %s0, 128, %s21, [#allocation3]
    $region5: #{tpu_custom_call.1} parent=1 // pred_fallthru
      _
    // Predicated region
    $region6: #{tpu_custom_call.1} parent=1 // pred_check
      _
    $region7: #{tpu_custom_call.1} parent=1 // pred_check_branch
      %25 = sbr.rel (0) target = $region9
    $region8: #{tpu_custom_call.1} parent=1 // pred_region
      %s27 = ssub.s32 512, 512
      %28 = vsyncadd [#allocation6], %s27
      %s29 = sshll.u32 [#allocation5], 4
      %s30 = int_to_ptr.vmem [resolvable:$true] %s29
      %35 = dma.hbm_to_vmem [thread:$0]  %s1, 512, %s30, [#allocation6], 128, 128, 8
    $region9: #{tpu_custom_call.1} parent=1 // pred_fallthru
      _
    // Predicated region
    $region10: #{tpu_custom_call.1} parent=1 // pred_check
      _
    $region11: #{tpu_custom_call.1} parent=1 // pred_check_branch
      %37 = sbr.rel (0) target = $region13
    $region12: #{tpu_custom_call.1} parent=1 // pred_region
      %s39 = ssub.s32 16, 16
      %40 = vsyncadd [#allocation6], %s39
      %s42 = sshll.u32 [#allocation7], 4
      %s43 = int_to_ptr.vmem [resolvable:$true] %s42
      %45 = dma.hbm_to_vmem [thread:$0]  %s2, 16, %s43, [#allocation6]
    $region13: #{tpu_custom_call.1} parent=1 // pred_fallthru
      _
    // Predicated region
    $region14: #{tpu_custom_call.1} parent=1 // pred_check
      _
    $region15: #{tpu_custom_call.1} parent=1 // pred_check_branch
      %47 = sbr.rel (0) target = $region17
    $region16: #{tpu_custom_call.1} parent=1 // pred_region
      %s49 = ssub.s32 2048, 2048
      %50 = vsyncadd [#allocation9], %s49
      %s51 = sshll.u32 [#allocation8], 4
      %s52 = int_to_ptr.vmem [resolvable:$true] %s51
      %57 = dma.hbm_to_vmem [thread:$0]  %s3, 2048, %s52, [#allocation9], 128, 128, 8
    $region17: #{tpu_custom_call.1} parent=1 // pred_fallthru
      _
    // Predicated region
    $region18: #{tpu_custom_call.1} parent=1 // pred_check
      _
    $region19: #{tpu_custom_call.1} parent=1 // pred_check_branch
      %59 = sbr.rel (0) target = $region21
    $region20: #{tpu_custom_call.1} parent=1 // pred_region
      %s61 = ssub.s32 16, 16
      %62 = vsyncadd [#allocation9], %s61
      %s64 = sshll.u32 [#allocation10], 4
      %s65 = int_to_ptr.vmem [resolvable:$true] %s64
      %67 = dma.hbm_to_vmem [thread:$0]  %s4, 16, %s65, [#allocation9]
    $region21: #{tpu_custom_call.1} parent=1 // pred_fallthru
      _
    // Predicated region
    $region22: #{tpu_custom_call.1} parent=1 // pred_check
      _
    $region23: #{tpu_custom_call.1} parent=1 // pred_check_branch
      %69 = sbr.rel (0) target = $region25
    $region24: #{tpu_custom_call.1} parent=1 // pred_region
      %70 = dma.done [#allocation3], 128
    $region25: #{tpu_custom_call.1} parent=1 // pred_fallthru
      _
    // Predicated region
    $region26: #{tpu_custom_call.1} parent=1 // pred_check
      _
    $region27: #{tpu_custom_call.1} parent=1 // pred_check_branch
      %72 = sbr.rel (0) target = $region29
    $region28: #{tpu_custom_call.1} parent=1 // pred_region
      %73 = dma.done [#allocation6], 512
    $region29: #{tpu_custom_call.1} parent=1 // pred_fallthru
      _
    // Predicated region
    $region30: #{tpu_custom_call.1} parent=1 // pred_check
      _
    $region31: #{tpu_custom_call.1} parent=1 // pred_check_branch
      %75 = sbr.rel (0) target = $region33
    $region32: #{tpu_custom_call.1} parent=1 // pred_region
      %76 = dma.done [#allocation6], 16
    $region33: #{tpu_custom_call.1} parent=1 // pred_fallthru
      _
    // Predicated region
    $region34: #{tpu_custom_call.1} parent=1 // pred_check
      _
    $region35: #{tpu_custom_call.1} parent=1 // pred_check_branch
      %78 = sbr.rel (0) target = $region37
    $region36: #{tpu_custom_call.1} parent=1 // pred_region
      %79 = dma.done [#allocation9], 2048
    $region37: #{tpu_custom_call.1} parent=1 // pred_fallthru
      _
    // Predicated region
    $region38: #{tpu_custom_call.1} parent=1 // pred_check
      _
    $region39: #{tpu_custom_call.1} parent=1 // pred_check_branch
      %81 = sbr.rel (0) target = $region41
    $region40: #{tpu_custom_call.1} parent=1 // pred_region
      %82 = dma.done [#allocation9], 16
    $region41: #{tpu_custom_call.1} parent=1 // pred_fallthru
      _
    %v83 = vld [vmem:[#allocation2] sm:$0xff]
    %v84 = vld [vmem:[#allocation5] sm:$0xff]
    %v85 = vld [vmem:[#allocation5 + $0x8] sm:$0xff]
    %v86 = vld [vmem:[#allocation5 + $0x10] sm:$0xff]
    %v87 = vld [vmem:[#allocation5 + $0x18] sm:$0xff]
    %v88 = vld [vmem:[#allocation7] sm:$0x1]
    %v90 = vlaneseq
    %v91 = vshrl.u32 %v90, 7
    %v92 = vsub.s32 0, %v91
    %v93 = vrot.slane %v88, %v92
    %vm95 = vcmask 261120
    %v97 = vsel %vm95, %v83, 0
    %99 = vmatprep.subr.mxu0 0.0
    %100 = vmatpush1.msra.mxu0 %v84
    %101 = vmatprep.subr.mxu0 0.0
    %102 = vmatpush1.msra.mxu0 %v85
    %103 = vmatprep.subr.mxu0 0.0
    %104 = vmatpush1.msra.mxu0 %v86
    %105 = vmatprep.subr.mxu0 0.0
    %106 = vmatpush1.msra.mxu0 %v87
    %107 = vmatprep.subr.mxu0 0.0
    %108 = vmatpush1.msra.mxu0 0.0
    %109 = vmatprep.subr.mxu0 0.0
    %110 = vmatpush1.msra.mxu0 0.0
    %111 = vmatprep.subr.mxu0 0.0
    %112 = vmatpush1.msra.mxu0 0.0
    %113 = vmatprep.subr.mxu0 0.0
    %114 = vmatpush1.msra.mxu0 0.0
    %115 = vmatprep.subr.mxu0 0.0
    %116 = vmatpush1.msra.mxu0 0.0
    %117 = vmatprep.subr.mxu0 0.0
    %118 = vmatpush1.msra.mxu0 0.0
    %119 = vmatprep.subr.mxu0 0.0
    %120 = vmatpush1.msra.mxu0 0.0
    %121 = vmatprep.subr.mxu0 0.0
    %122 = vmatpush1.msra.mxu0 0.0
    %123 = vmatprep.subr.mxu0 0.0
    %124 = vmatpush1.msra.mxu0 0.0
    %125 = vmatprep.subr.mxu0 0.0
    %126 = vmatpush1.msra.mxu0 0.0
    %127 = vmatprep.subr.mxu0 0.0
    %128 = vmatpush1.msra.mxu0 0.0
    %129 = vmatprep.subr.mxu0 0.0
    %130 = vmatpush1.msra.mxu0 0.0
    %131 = vmatprep.subr.mxu0 0.0
    %132 = vmatpush1.msra.mxu0 0.0
    %133 = vmatprep.subr.mxu0 0.0
    %134 = vmatpush1.msra.mxu0 0.0
    %135 = vmatprep.subr.mxu0 0.0
    %136 = vmatpush1.msra.mxu0 0.0
    %137 = vmatprep.subr.mxu0 0.0
    %138 = vmatpush1.msra.mxu0 0.0
    %139 = vmatprep.subr.mxu0 0.0
    %140 = vmatpush1.msra.mxu0 0.0
    %141 = vmatprep.subr.mxu0 0.0
    %142 = vmatpush1.msra.mxu0 0.0
    %143 = vmatprep.subr.mxu0 0.0
    %144 = vmatpush1.msra.mxu0 0.0
    %145 = vmatprep.subr.mxu0 0.0
    %146 = vmatpush1.msra.mxu0 0.0
    %147 = vmatprep.subr.mxu0 0.0
    %148 = vmatpush1.msra.mxu0 0.0
    %149 = vmatprep.subr.mxu0 0.0
    %150 = vmatpush1.msra.mxu0 0.0
    %151 = vmatprep.subr.mxu0 0.0
    %152 = vmatpush1.msra.mxu0 0.0
    %153 = vmatprep.subr.mxu0 0.0
    %154 = vmatpush1.msra.mxu0 0.0
    %155 = vmatprep.subr.mxu0 0.0
    %156 = vmatpush1.msra.mxu0 0.0
    %157 = vmatprep.subr.mxu0 0.0
    %158 = vmatpush1.msra.mxu0 0.0
    %159 = vmatprep.subr.mxu0 0.0
    %160 = vmatpush1.msra.mxu0 0.0
    %161 = vmatprep.subr.mxu0 0.0
    %162 = vmatpush1.msra.mxu0 0.0
    %163 = vmatprep.mubr.f32.mxu0 0.0
    %164 = vmatmul.mubr.f32.gmra.mrb[0].mxu0 %v97
    %v165 = vpop.f32.mrb[0].mxu0
    %v166 = vadd.f32 %v93, %v165
    %v167 = vpop.f32.mrb[0].mxu0
    %168 = vdwg.mxu0
    %v169 = vmax.f32 %v166, 0.0
    %vm170 = vcmp.gt.f32.partialorder %v166, 0.0
    %172 = vrot.lane.b32.xlu0 %v166, 64
    %v173 = vpop.permute.xlu0 %172
    %v175 = vsel %vm170, %v173, 0.0
    %v176 = vadd.f32 %v169, %v175
    %178 = vrot.lane.b32.xlu0 %v169, 64
    %v179 = vpop.permute.xlu0 %178
    %vm181 = vcmask 523264
    %v182 = vsel %vm181, %v176, %v179
    %v183 = vld [vmem:[#allocation8] sm:$0xff]
    %v184 = vld [vmem:[#allocation8 + $0x8] sm:$0xff]
    %v185 = vld [vmem:[#allocation8 + $0x10] sm:$0xff]
    %v186 = vld [vmem:[#allocation8 + $0x18] sm:$0xff]
    %v187 = vld [vmem:[#allocation8 + $0x20] sm:$0xff]
    %v188 = vld [vmem:[#allocation8 + $0x28] sm:$0xff]
    %v189 = vld [vmem:[#allocation8 + $0x30] sm:$0xff]
    %v190 = vld [vmem:[#allocation8 + $0x38] sm:$0xff]
    %v191 = vld [vmem:[#allocation8 + $0x40] sm:$0xff]
    %v192 = vld [vmem:[#allocation8 + $0x48] sm:$0xff]
    %v193 = vld [vmem:[#allocation8 + $0x50] sm:$0xff]
    %v194 = vld [vmem:[#allocation8 + $0x58] sm:$0xff]
    %v195 = vld [vmem:[#allocation8 + $0x60] sm:$0xff]
    %v196 = vld [vmem:[#allocation8 + $0x68] sm:$0xff]
    %v197 = vld [vmem:[#allocation8 + $0x70] sm:$0xff]
    %v198 = vld [vmem:[#allocation8 + $0x78] sm:$0xff]
    %v199 = vld [vmem:[#allocation10] sm:$0x1]
    %v201 = vlaneseq
    %v202 = vshrl.u32 %v201, 7
    %v203 = vsub.s32 0, %v202
    %v204 = vrot.slane %v199, %v203
    %206 = vmatprep.subr.mxu0 0.0
    %207 = vmatpush1.msra.mxu0 %v183
    %208 = vmatprep.subr.mxu0 0.0
    %209 = vmatpush1.msra.mxu0 %v184
    %210 = vmatprep.subr.mxu0 0.0
    %211 = vmatpush1.msra.mxu0 %v185
    %212 = vmatprep.subr.mxu0 0.0
    %213 = vmatpush1.msra.mxu0 %v186
    %214 = vmatprep.subr.mxu0 0.0
    %215 = vmatpush1.msra.mxu0 %v187
    %216 = vmatprep.subr.mxu0 0.0
    %217 = vmatpush1.msra.mxu0 %v188
    %218 = vmatprep.subr.mxu0 0.0
    %219 = vmatpush1.msra.mxu0 %v189
    %220 = vmatprep.subr.mxu0 0.0
    %221 = vmatpush1.msra.mxu0 %v190
    %222 = vmatprep.subr.mxu0 0.0
    %223 = vmatpush1.msra.mxu0 %v191
    %224 = vmatprep.subr.mxu0 0.0
    %225 = vmatpush1.msra.mxu0 %v192
    %226 = vmatprep.subr.mxu0 0.0
    %227 = vmatpush1.msra.mxu0 %v193
    %228 = vmatprep.subr.mxu0 0.0
    %229 = vmatpush1.msra.mxu0 %v194
    %230 = vmatprep.subr.mxu0 0.0
    %231 = vmatpush1.msra.mxu0 %v195
    %232 = vmatprep.subr.mxu0 0.0
    %233 = vmatpush1.msra.mxu0 %v196
    %234 = vmatprep.subr.mxu0 0.0
    %235 = vmatpush1.msra.mxu0 %v197
    %236 = vmatprep.subr.mxu0 0.0
    %237 = vmatpush1.msra.mxu0 %v198
    %238 = vmatprep.subr.mxu0 0.0
    %239 = vmatpush1.msra.mxu0 0.0
    %240 = vmatprep.subr.mxu0 0.0
    %241 = vmatpush1.msra.mxu0 0.0
    %242 = vmatprep.subr.mxu0 0.0
    %243 = vmatpush1.msra.mxu0 0.0
    %244 = vmatprep.subr.mxu0 0.0
    %245 = vmatpush1.msra.mxu0 0.0
    %246 = vmatprep.subr.mxu0 0.0
    %247 = vmatpush1.msra.mxu0 0.0
    %248 = vmatprep.subr.mxu0 0.0
    %249 = vmatpush1.msra.mxu0 0.0
    %250 = vmatprep.subr.mxu0 0.0
    %251 = vmatpush1.msra.mxu0 0.0
    %252 = vmatprep.subr.mxu0 0.0
    %253 = vmatpush1.msra.mxu0 0.0
    %254 = vmatprep.subr.mxu0 0.0
    %255 = vmatpush1.msra.mxu0 0.0
    %256 = vmatprep.subr.mxu0 0.0
    %257 = vmatpush1.msra.mxu0 0.0
    %258 = vmatprep.subr.mxu0 0.0
    %259 = vmatpush1.msra.mxu0 0.0
    %260 = vmatprep.subr.mxu0 0.0
    %261 = vmatpush1.msra.mxu0 0.0
    %262 = vmatprep.subr.mxu0 0.0
    %263 = vmatpush1.msra.mxu0 0.0
    %264 = vmatprep.subr.mxu0 0.0
    %265 = vmatpush1.msra.mxu0 0.0
    %266 = vmatprep.subr.mxu0 0.0
    %267 = vmatpush1.msra.mxu0 0.0
    %268 = vmatprep.subr.mxu0 0.0
    %269 = vmatpush1.msra.mxu0 0.0
    %270 = vmatprep.mubr.f32.mxu0 0.0
    %271 = vmatmul.mubr.f32.gmra.mrb[0].mxu0 %v182
    %v272 = vpop.f32.mrb[0].mxu0
    %v273 = vadd.f32 %v204, %v272
    %v274 = vpop.f32.mrb[0].mxu0
    %275 = vdwg.mxu0
    %276 = vst [vmem:[#allocation11] sm:$0xff] %v273
    // Predicated region
    $region42: #{tpu_custom_call.1} parent=1 // pred_check
      _
    $region43: #{tpu_custom_call.1} parent=1 // pred_check_branch
      %278 = sbr.rel (0) target = $region45
    $region44: #{tpu_custom_call.1} parent=1 // pred_region
      %s280 = ssub.s32 128, 128
      %281 = vsyncadd [#allocation4], %s280
      %s283 = sshll.u32 [#allocation11], 4
      %s284 = int_to_ptr.vmem [resolvable:$true] %s283
      %286 = dma.vmem_to_hbm [thread:$0]  %s284, 128, %s5, [#allocation4]
    $region45: #{tpu_custom_call.1} parent=1 // pred_fallthru
      _
    // Predicated region
    $region46: #{tpu_custom_call.1} parent=1 // pred_check
      _
    $region47: #{tpu_custom_call.1} parent=1 // pred_check_branch
      %288 = sbr.rel (0) target = $region49
    $region48: #{tpu_custom_call.1} parent=1 // pred_region
      %289 = dma.done [#allocation4], 128
    $region49: #{tpu_custom_call.1} parent=1 // pred_fallthru
      _
    %290 = vsyncpa [#allocation3], 1
    %291 = vsyncpa [#allocation6], 1
    %292 = vsyncpa [#allocation9], 1
    %293 = vsyncpa [#allocation4], 1

</llo_original>
